<compile_context>
chip_gen: v5e
topology: v5e:2x2
jax: 0.10.0
libtpu: 0.0.40
codegen_flags: <defaults>
</compile_context>

<pallas_src>
import jax
import jax.numpy as jnp
from jax.experimental import pallas as pl
from jax.experimental.pallas import tpu as pltpu


def wavenet_affine_kernel(a_ref, x_ref, bias_ref, o_ref):
    # a_ref    : SMEM (3, 16) f32  -- per-channel tap coefficients A0/A1/A2
    # x_ref    : VMEM (1, 1, TH, W)
    # bias_ref : VMEM (16, W)      -- per-(channel, column) effective bias
    # o_ref    : VMEM (1, 16, TH, W)  (NCHW block, written directly)
    x = x_ref[0, 0]                                    # (TH, W)
    TH = x.shape[0]
    zero_col = jnp.zeros((TH, 1), x.dtype)
    # shifted taps: x[:, w+1] and x[:, w+2], zero past the row end
    xs1 = jnp.concatenate([x[:, 1:], zero_col], axis=1)              # (TH, W)
    xs2 = jnp.concatenate([x[:, 2:], zero_col, zero_col], axis=1)    # (TH, W)
    bias = bias_ref[...]                               # (16, W)
    for c in range(16):                                # unrolled scalar*vector FMAs
        a0 = a_ref[0, c]
        a1 = a_ref[1, c]
        a2 = a_ref[2, c]
        o_ref[0, c, :, :] = x * a0 + xs1 * a1 + xs2 * a2 + bias[c][None, :]


def _choose_row_tile(H, W):
    """Pick TH so the (16, TH, W) f32 output block stays ~<= 2 MiB (fits the
    double-buffered pipeline within scoped VMEM on v5e / v6e / v7x)."""
    max_plane_elems = 32 * 1024                        # TH * W budget per plane
    if H * W <= max_plane_elems:
        return H
    th = (max_plane_elems // max(W, 1)) // 8 * 8
    th = min(max(th, 8), H)
    while th > 8 and H % th:
        th -= 8
    if th < 8 or H % th:
        return H
    return th


def model_forward(x_nchw, params):
    w1, b1, w3, b3, w5, b5 = params
    N, C, H, W = x_nchw.shape
    assert C == 1
    x = x_nchw.astype(jnp.float32)
    f32 = jnp.float32

    # ---- pre-compose the (fully linear) network into a 3-tap affine map ----
    a = w1[:, 0, 0, 0].astype(f32)                     # (16,) 1x1-conv weight
    b1v = b1.astype(f32)                               # (16,)
    W3a = w3[:, :, 0, 0].T.astype(f32)                 # (16, 32) tap at w
    W3b = w3[:, :, 0, 1].T.astype(f32)                 # (16, 32) tap at w+1
    b3v = b3.astype(f32)                               # (32,)
    W5a = w5[:, :, 0, 0].T.astype(f32)                 # (32, 16)
    W5b = w5[:, :, 0, 1].T.astype(f32)                 # (32, 16)
    b5v = b5.astype(f32)                               # (16,)

    u0 = a @ W3a                                       # (32,)
    u1 = a @ W3b                                       # (32,)
    A0 = u0 @ W5a + a                                  # (16,)
    A1 = u1 @ W5a + u0 @ W5b                           # (16,)
    A2 = u1 @ W5b                                      # (16,)

    c3_full = b1v @ W3a + b1v @ W3b + b3v              # (32,) bias entering conv-5
    corr = b1v @ W3b                                   # (32,) bias killed by y1 pad
    bias_full = c3_full @ (W5a + W5b) + b5v + b1v      # (16,) interior columns
    bias_tab = jnp.tile(bias_full[None, :], (W, 1))    # (W, 16)
    if W >= 2:
        bias_tab = bias_tab.at[W - 2].set(bias_full - corr @ W5b)
    bias_tab = bias_tab.at[W - 1].set(bias_full - corr @ W5a - c3_full @ W5b)

    a_coef = jnp.stack([A0, A1, A2], axis=0)           # (3, 16)  -> SMEM
    bias_cw = bias_tab.T                               # (16, W)  -> VMEM

    # ---- pallas call: grid over (batch, H-tiles), output written in NCHW ----
    TH = _choose_row_tile(H, W)
    grid = (N, H // TH)

    out = pl.pallas_call(
        wavenet_affine_kernel,
        out_shape=jax.ShapeDtypeStruct((N, 16, H, W), jnp.float32),
        grid=grid,
        in_specs=[
            pl.BlockSpec(memory_space=pltpu.MemorySpace.SMEM),          # coefs
            pl.BlockSpec((1, 1, TH, W), lambda n, h: (n, 0, h, 0)),     # x
            pl.BlockSpec((16, W), lambda n, h: (0, 0)),                 # bias
        ],
        out_specs=pl.BlockSpec((1, 16, TH, W), lambda n, h: (n, 0, h, 0)),
        compiler_params=pltpu.CompilerParams(
            dimension_semantics=("parallel", "parallel"),
            vmem_limit_bytes=32 * 1024 * 1024),
    )(a_coef, x, bias_cw)
    return out


def ref_forward(x_nchw, params):
    """Pure-JAX reference of the PyTorch forward pass (sequential convs)."""
    w1, b1, w3, b3, w5, b5 = params
    x = x_nchw.astype(jnp.float32)
    y1 = x[:, 0, :, :, None] * w1[:, 0, 0, 0] + b1                     # (N,H,W,16)
    y1p = jnp.pad(y1, ((0, 0), (0, 0), (0, 1), (0, 0)))
    y3 = (jnp.einsum('nhwi,oi->nhwo', y1p[:, :, :-1, :], w3[:, :, 0, 0])
          + jnp.einsum('nhwi,oi->nhwo', y1p[:, :, 1:, :], w3[:, :, 0, 1])
          + b3)                                                        # (N,H,W,32)
    y3p = jnp.pad(y3, ((0, 0), (0, 0), (0, 1), (0, 0)))
    y5 = (jnp.einsum('nhwi,oi->nhwo', y3p[:, :, :-1, :], w5[:, :, 0, 0])
          + jnp.einsum('nhwi,oi->nhwo', y3p[:, :, 1:, :], w5[:, :, 0, 1])
          + b5)                                                        # (N,H,W,16)
    return (y5 + y1).transpose(0, 3, 1, 2)


if __name__ == "__main__":
    key = jax.random.PRNGKey(0)
    ks = jax.random.split(key, 7)
    N, H, W = 2, 8, 16
    x = jax.random.normal(ks[0], (N, 1, H, W), jnp.float32)

    # Deterministic synthetic parameters (PyTorch conv weight layouts).
    w1 = jax.random.normal(ks[1], (16, 1, 1, 1), jnp.float32) * 0.5
    b1 = jax.random.normal(ks[2], (16,), jnp.float32) * 0.1
    w3 = jax.random.normal(ks[3], (32, 16, 1, 2), jnp.float32) * 0.25
    b3 = jax.random.normal(ks[4], (32,), jnp.float32) * 0.1
    w5 = jax.random.normal(ks[5], (16, 32, 1, 2), jnp.float32) * 0.25
    b5 = jax.random.normal(ks[6], (16,), jnp.float32) * 0.1
    params = (w1, b1, w3, b3, w5, b5)

    out = jax.block_until_ready(model_forward(x, params))
    ref = jax.block_until_ready(ref_forward(x, params))

    assert out.shape == (N, 16, H, W), out.shape
    err = float(jnp.max(jnp.abs(out - ref)))
    assert err < 1e-4, err
    print("KERNEL_OK")
</pallas_src>

<mosaic_0001>
module attributes {stable_mosaic.version = 11 : i64} {
  func.func @wavenet_affine_kernel(%arg0: i32, %arg1: i32, %arg2: memref<3x16xf32, #tpu.memory_space<smem>>, %arg3: memref<1x1x8x16xf32, #tpu.memory_space<vmem>>, %arg4: memref<16x16xf32, #tpu.memory_space<vmem>>, %arg5: memref<1x16x8x16xf32, #tpu.memory_space<vmem>>) attributes {dimension_semantics = [#tpu.dimension_semantics<parallel>, #tpu.dimension_semantics<parallel>], iteration_bounds = array<i64: 2, 1>, scalar_prefetch = 0 : i64, scratch_operands = 0 : i64, tpu.core_type = #tpu.core_type<tc>, window_params = [{transform_indices = @transform_0, window_bounds = array<i64: 3, 16>}, {transform_indices = @transform_1, window_bounds = array<i64: 1, 1, 8, 16>}, {pipeline_mode = #tpu.pipeline_mode<synchronous>, transform_indices = @transform_2, window_bounds = array<i64: 16, 16>}, {transform_indices = @transform_3, window_bounds = array<i64: 1, 16, 8, 16>}]} {
    %c0 = arith.constant 0 : index
    %c0_0 = arith.constant 0 : index
    %c0_1 = arith.constant 0 : index
    %c0_2 = arith.constant 0 : index
    %0 = vector.load %arg3[%c0, %c0_0, %c0_1, %c0_2] : memref<1x1x8x16xf32, #tpu.memory_space<vmem>>, vector<1x1x8x16xf32>
    %1 = vector.shape_cast %0 : vector<1x1x8x16xf32> to vector<8x16xf32>
    %cst = arith.constant 0.000000e+00 : f32
    %2 = vector.broadcast %cst : f32 to vector<8x1xf32>
    %3 = vector.extract_strided_slice %1 {offsets = [0, 1], sizes = [8, 15], strides = [1, 1]} : vector<8x16xf32> to vector<8x15xf32>
    %4 = tpu.concatenate %3, %2 in 1 : vector<8x15xf32>, vector<8x1xf32> -> vector<8x16xf32>
    %5 = vector.extract_strided_slice %1 {offsets = [0, 2], sizes = [8, 14], strides = [1, 1]} : vector<8x16xf32> to vector<8x14xf32>
    %6 = tpu.concatenate %5, %2, %2 in 1 : vector<8x14xf32>, vector<8x1xf32>, vector<8x1xf32> -> vector<8x16xf32>
    %c0_3 = arith.constant 0 : index
    %c0_4 = arith.constant 0 : index
    %7 = vector.load %arg4[%c0_3, %c0_4] : memref<16x16xf32, #tpu.memory_space<vmem>>, vector<16x16xf32>
    %c0_5 = arith.constant 0 : index
    %c0_6 = arith.constant 0 : index
    %8 = memref.load %arg2[%c0_5, %c0_6] : memref<3x16xf32, #tpu.memory_space<smem>>
    %c1 = arith.constant 1 : index
    %c0_7 = arith.constant 0 : index
    %9 = memref.load %arg2[%c1, %c0_7] : memref<3x16xf32, #tpu.memory_space<smem>>
    %c2 = arith.constant 2 : index
    %c0_8 = arith.constant 0 : index
    %10 = memref.load %arg2[%c2, %c0_8] : memref<3x16xf32, #tpu.memory_space<smem>>
    %11 = vector.broadcast %8 : f32 to vector<8x16xf32>
    %12 = arith.mulf %1, %11 : vector<8x16xf32>
    %13 = vector.broadcast %9 : f32 to vector<8x16xf32>
    %14 = arith.mulf %4, %13 : vector<8x16xf32>
    %15 = arith.addf %12, %14 : vector<8x16xf32>
    %16 = vector.broadcast %10 : f32 to vector<8x16xf32>
    %17 = arith.mulf %6, %16 : vector<8x16xf32>
    %18 = arith.addf %15, %17 : vector<8x16xf32>
    %19 = vector.extract_strided_slice %7 {offsets = [0, 0], sizes = [1, 16], strides = [1, 1]} : vector<16x16xf32> to vector<1x16xf32>
    %20 = vector.shape_cast %19 : vector<1x16xf32> to vector<16xf32>
    %21 = vector.shape_cast %20 : vector<16xf32> to vector<1x16xf32>
    %22 = vector.broadcast %21 : vector<1x16xf32> to vector<8x16xf32>
    %23 = arith.addf %18, %22 : vector<8x16xf32>
    %c0_9 = arith.constant 0 : index
    %c0_10 = arith.constant 0 : index
    %c0_11 = arith.constant 0 : index
    %c0_12 = arith.constant 0 : index
    %24 = vector.load %arg5[%c0_9, %c0_10, %c0_11, %c0_12] : memref<1x16x8x16xf32, #tpu.memory_space<vmem>>, vector<1x1x8x16xf32>
    %25 = vector.shape_cast %24 : vector<1x1x8x16xf32> to vector<8x16xf32>
    %26 = vector.shape_cast %23 : vector<8x16xf32> to vector<1x1x8x16xf32>
    tpu.vector_store %arg5[%c0_9, %c0_10, %c0_11, %c0_12], %26 {strides = array<i32>} : memref<1x16x8x16xf32, #tpu.memory_space<vmem>>, vector<1x1x8x16xf32>,
    %c0_13 = arith.constant 0 : index
    %c1_14 = arith.constant 1 : index
    %27 = memref.load %arg2[%c0_13, %c1_14] : memref<3x16xf32, #tpu.memory_space<smem>>
    %c1_15 = arith.constant 1 : index
    %c1_16 = arith.constant 1 : index
    %28 = memref.load %arg2[%c1_15, %c1_16] : memref<3x16xf32, #tpu.memory_space<smem>>
    %c2_17 = arith.constant 2 : index
    %c1_18 = arith.constant 1 : index
    %29 = memref.load %arg2[%c2_17, %c1_18] : memref<3x16xf32, #tpu.memory_space<smem>>
    %30 = vector.broadcast %27 : f32 to vector<8x16xf32>
    %31 = arith.mulf %1, %30 : vector<8x16xf32>
    %32 = vector.broadcast %28 : f32 to vector<8x16xf32>
    %33 = arith.mulf %4, %32 : vector<8x16xf32>
    %34 = arith.addf %31, %33 : vector<8x16xf32>
    %35 = vector.broadcast %29 : f32 to vector<8x16xf32>
    %36 = arith.mulf %6, %35 : vector<8x16xf32>
    %37 = arith.addf %34, %36 : vector<8x16xf32>
    %38 = vector.extract_strided_slice %7 {offsets = [1, 0], sizes = [1, 16], strides = [1, 1]} : vector<16x16xf32> to vector<1x16xf32>
    %39 = vector.shape_cast %38 : vector<1x16xf32> to vector<16xf32>
    %40 = vector.shape_cast %39 : vector<16xf32> to vector<1x16xf32>
    %41 = vector.broadcast %40 : vector<1x16xf32> to vector<8x16xf32>
    %42 = arith.addf %37, %41 : vector<8x16xf32>
    %c0_19 = arith.constant 0 : index
    %c1_20 = arith.constant 1 : index
    %c0_21 = arith.constant 0 : index
    %c0_22 = arith.constant 0 : index
    %43 = vector.load %arg5[%c0_19, %c1_20, %c0_21, %c0_22] : memref<1x16x8x16xf32, #tpu.memory_space<vmem>>, vector<1x1x8x16xf32>
    %44 = vector.shape_cast %43 : vector<1x1x8x16xf32> to vector<8x16xf32>
    %45 = vector.shape_cast %42 : vector<8x16xf32> to vector<1x1x8x16xf32>
    tpu.vector_store %arg5[%c0_19, %c1_20, %c0_21, %c0_22], %45 {strides = array<i32>} : memref<1x16x8x16xf32, #tpu.memory_space<vmem>>, vector<1x1x8x16xf32>,
    %c0_23 = arith.constant 0 : index
    %c2_24 = arith.constant 2 : index
    %46 = memref.load %arg2[%c0_23, %c2_24] : memref<3x16xf32, #tpu.memory_space<smem>>
    %c1_25 = arith.constant 1 : index
    %c2_26 = arith.constant 2 : index
    %47 = memref.load %arg2[%c1_25, %c2_26] : memref<3x16xf32, #tpu.memory_space<smem>>
    %c2_27 = arith.constant 2 : index
    %c2_28 = arith.constant 2 : index
    %48 = memref.load %arg2[%c2_27, %c2_28] : memref<3x16xf32, #tpu.memory_space<smem>>
    %49 = vector.broadcast %46 : f32 to vector<8x16xf32>
    %50 = arith.mulf %1, %49 : vector<8x16xf32>
    %51 = vector.broadcast %47 : f32 to vector<8x16xf32>
    %52 = arith.mulf %4, %51 : vector<8x16xf32>
    %53 = arith.addf %50, %52 : vector<8x16xf32>
    %54 = vector.broadcast %48 : f32 to vector<8x16xf32>
    %55 = arith.mulf %6, %54 : vector<8x16xf32>
    %56 = arith.addf %53, %55 : vector<8x16xf32>
    %57 = vector.extract_strided_slice %7 {offsets = [2, 0], sizes = [1, 16], strides = [1, 1]} : vector<16x16xf32> to vector<1x16xf32>
    %58 = vector.shape_cast %57 : vector<1x16xf32> to vector<16xf32>
    %59 = vector.shape_cast %58 : vector<16xf32> to vector<1x16xf32>
    %60 = vector.broadcast %59 : vector<1x16xf32> to vector<8x16xf32>
    %61 = arith.addf %56, %60 : vector<8x16xf32>
    %c0_29 = arith.constant 0 : index
    %c2_30 = arith.constant 2 : index
    %c0_31 = arith.constant 0 : index
    %c0_32 = arith.constant 0 : index
    %62 = vector.load %arg5[%c0_29, %c2_30, %c0_31, %c0_32] : memref<1x16x8x16xf32, #tpu.memory_space<vmem>>, vector<1x1x8x16xf32>
    %63 = vector.shape_cast %62 : vector<1x1x8x16xf32> to vector<8x16xf32>
    %64 = vector.shape_cast %61 : vector<8x16xf32> to vector<1x1x8x16xf32>
    tpu.vector_store %arg5[%c0_29, %c2_30, %c0_31, %c0_32], %64 {strides = array<i32>} : memref<1x16x8x16xf32, #tpu.memory_space<vmem>>, vector<1x1x8x16xf32>,
    %c0_33 = arith.constant 0 : index
    %c3 = arith.constant 3 : index
    %65 = memref.load %arg2[%c0_33, %c3] : memref<3x16xf32, #tpu.memory_space<smem>>
    %c1_34 = arith.constant 1 : index
    %c3_35 = arith.constant 3 : index
    %66 = memref.load %arg2[%c1_34, %c3_35] : memref<3x16xf32, #tpu.memory_space<smem>>
    %c2_36 = arith.constant 2 : index
    %c3_37 = arith.constant 3 : index
    %67 = memref.load %arg2[%c2_36, %c3_37] : memref<3x16xf32, #tpu.memory_space<smem>>
    %68 = vector.broadcast %65 : f32 to vector<8x16xf32>
    %69 = arith.mulf %1, %68 : vector<8x16xf32>
    %70 = vector.broadcast %66 : f32 to vector<8x16xf32>
    %71 = arith.mulf %4, %70 : vector<8x16xf32>
    %72 = arith.addf %69, %71 : vector<8x16xf32>
    %73 = vector.broadcast %67 : f32 to vector<8x16xf32>
    %74 = arith.mulf %6, %73 : vector<8x16xf32>
    %75 = arith.addf %72, %74 : vector<8x16xf32>
    %76 = vector.extract_strided_slice %7 {offsets = [3, 0], sizes = [1, 16], strides = [1, 1]} : vector<16x16xf32> to vector<1x16xf32>
    %77 = vector.shape_cast %76 : vector<1x16xf32> to vector<16xf32>
    %78 = vector.shape_cast %77 : vector<16xf32> to vector<1x16xf32>
    %79 = vector.broadcast %78 : vector<1x16xf32> to vector<8x16xf32>
    %80 = arith.addf %75, %79 : vector<8x16xf32>
    %c0_38 = arith.constant 0 : index
    %c3_39 = arith.constant 3 : index
    %c0_40 = arith.constant 0 : index
    %c0_41 = arith.constant 0 : index
    %81 = vector.load %arg5[%c0_38, %c3_39, %c0_40, %c0_41] : memref<1x16x8x16xf32, #tpu.memory_space<vmem>>, vector<1x1x8x16xf32>
    %82 = vector.shape_cast %81 : vector<1x1x8x16xf32> to vector<8x16xf32>
    %83 = vector.shape_cast %80 : vector<8x16xf32> to vector<1x1x8x16xf32>
    tpu.vector_store %arg5[%c0_38, %c3_39, %c0_40, %c0_41], %83 {strides = array<i32>} : memref<1x16x8x16xf32, #tpu.memory_space<vmem>>, vector<1x1x8x16xf32>,
    %c0_42 = arith.constant 0 : index
    %c4 = arith.constant 4 : index
    %84 = memref.load %arg2[%c0_42, %c4] : memref<3x16xf32, #tpu.memory_space<smem>>
    %c1_43 = arith.constant 1 : index
    %c4_44 = arith.constant 4 : index
    %85 = memref.load %arg2[%c1_43, %c4_44] : memref<3x16xf32, #tpu.memory_space<smem>>
    %c2_45 = arith.constant 2 : index
    %c4_46 = arith.constant 4 : index
    %86 = memref.load %arg2[%c2_45, %c4_46] : memref<3x16xf32, #tpu.memory_space<smem>>
    %87 = vector.broadcast %84 : f32 to vector<8x16xf32>
    %88 = arith.mulf %1, %87 : vector<8x16xf32>
    %89 = vector.broadcast %85 : f32 to vector<8x16xf32>
    %90 = arith.mulf %4, %89 : vector<8x16xf32>
    %91 = arith.addf %88, %90 : vector<8x16xf32>
    %92 = vector.broadcast %86 : f32 to vector<8x16xf32>
    %93 = arith.mulf %6, %92 : vector<8x16xf32>
    %94 = arith.addf %91, %93 : vector<8x16xf32>
    %95 = vector.extract_strided_slice %7 {offsets = [4, 0], sizes = [1, 16], strides = [1, 1]} : vector<16x16xf32> to vector<1x16xf32>
    %96 = vector.shape_cast %95 : vector<1x16xf32> to vector<16xf32>
    %97 = vector.shape_cast %96 : vector<16xf32> to vector<1x16xf32>
    %98 = vector.broadcast %97 : vector<1x16xf32> to vector<8x16xf32>
    %99 = arith.addf %94, %98 : vector<8x16xf32>
    %c0_47 = arith.constant 0 : index
    %c4_48 = arith.constant 4 : index
    %c0_49 = arith.constant 0 : index
    %c0_50 = arith.constant 0 : index
    %100 = vector.load %arg5[%c0_47, %c4_48, %c0_49, %c0_50] : memref<1x16x8x16xf32, #tpu.memory_space<vmem>>, vector<1x1x8x16xf32>
    %101 = vector.shape_cast %100 : vector<1x1x8x16xf32> to vector<8x16xf32>
    %102 = vector.shape_cast %99 : vector<8x16xf32> to vector<1x1x8x16xf32>
    tpu.vector_store %arg5[%c0_47, %c4_48, %c0_49, %c0_50], %102 {strides = array<i32>} : memref<1x16x8x16xf32, #tpu.memory_space<vmem>>, vector<1x1x8x16xf32>,
    %c0_51 = arith.constant 0 : index
    %c5 = arith.constant 5 : index
    %103 = memref.load %arg2[%c0_51, %c5] : memref<3x16xf32, #tpu.memory_space<smem>>
    %c1_52 = arith.constant 1 : index
    %c5_53 = arith.constant 5 : index
    %104 = memref.load %arg2[%c1_52, %c5_53] : memref<3x16xf32, #tpu.memory_space<smem>>
    %c2_54 = arith.constant 2 : index
    %c5_55 = arith.constant 5 : index
    %105 = memref.load %arg2[%c2_54, %c5_55] : memref<3x16xf32, #tpu.memory_space<smem>>
    %106 = vector.broadcast %103 : f32 to vector<8x16xf32>
    %107 = arith.mulf %1, %106 : vector<8x16xf32>
    %108 = vector.broadcast %104 : f32 to vector<8x16xf32>
    %109 = arith.mulf %4, %108 : vector<8x16xf32>
    %110 = arith.addf %107, %109 : vector<8x16xf32>
    %111 = vector.broadcast %105 : f32 to vector<8x16xf32>
    %112 = arith.mulf %6, %111 : vector<8x16xf32>
    %113 = arith.addf %110, %112 : vector<8x16xf32>
    %114 = vector.extract_strided_slice %7 {offsets = [5, 0], sizes = [1, 16], strides = [1, 1]} : vector<16x16xf32> to vector<1x16xf32>
    %115 = vector.shape_cast %114 : vector<1x16xf32> to vector<16xf32>
    %116 = vector.shape_cast %115 : vector<16xf32> to vector<1x16xf32>
    %117 = vector.broadcast %116 : vector<1x16xf32> to vector<8x16xf32>
    %118 = arith.addf %113, %117 : vector<8x16xf32>
    %c0_56 = arith.constant 0 : index
    %c5_57 = arith.constant 5 : index
    %c0_58 = arith.constant 0 : index
    %c0_59 = arith.constant 0 : index
    %119 = vector.load %arg5[%c0_56, %c5_57, %c0_58, %c0_59] : memref<1x16x8x16xf32, #tpu.memory_space<vmem>>, vector<1x1x8x16xf32>
    %120 = vector.shape_cast %119 : vector<1x1x8x16xf32> to vector<8x16xf32>
    %121 = vector.shape_cast %118 : vector<8x16xf32> to vector<1x1x8x16xf32>
    tpu.vector_store %arg5[%c0_56, %c5_57, %c0_58, %c0_59], %121 {strides = array<i32>} : memref<1x16x8x16xf32, #tpu.memory_space<vmem>>, vector<1x1x8x16xf32>,
    %c0_60 = arith.constant 0 : index
    %c6 = arith.constant 6 : index
    %122 = memref.load %arg2[%c0_60, %c6] : memref<3x16xf32, #tpu.memory_space<smem>>
    %c1_61 = arith.constant 1 : index
    %c6_62 = arith.constant 6 : index
    %123 = memref.load %arg2[%c1_61, %c6_62] : memref<3x16xf32, #tpu.memory_space<smem>>
    %c2_63 = arith.constant 2 : index
    %c6_64 = arith.constant 6 : index
    %124 = memref.load %arg2[%c2_63, %c6_64] : memref<3x16xf32, #tpu.memory_space<smem>>
    %125 = vector.broadcast %122 : f32 to vector<8x16xf32>
    %126 = arith.mulf %1, %125 : vector<8x16xf32>
    %127 = vector.broadcast %123 : f32 to vector<8x16xf32>
    %128 = arith.mulf %4, %127 : vector<8x16xf32>
    %129 = arith.addf %126, %128 : vector<8x16xf32>
    %130 = vector.broadcast %124 : f32 to vector<8x16xf32>
    %131 = arith.mulf %6, %130 : vector<8x16xf32>
    %132 = arith.addf %129, %131 : vector<8x16xf32>
    %133 = vector.extract_strided_slice %7 {offsets = [6, 0], sizes = [1, 16], strides = [1, 1]} : vector<16x16xf32> to vector<1x16xf32>
    %134 = vector.shape_cast %133 : vector<1x16xf32> to vector<16xf32>
    %135 = vector.shape_cast %134 : vector<16xf32> to vector<1x16xf32>
    %136 = vector.broadcast %135 : vector<1x16xf32> to vector<8x16xf32>
    %137 = arith.addf %132, %136 : vector<8x16xf32>
    %c0_65 = arith.constant 0 : index
    %c6_66 = arith.constant 6 : index
    %c0_67 = arith.constant 0 : index
    %c0_68 = arith.constant 0 : index
    %138 = vector.load %arg5[%c0_65, %c6_66, %c0_67, %c0_68] : memref<1x16x8x16xf32, #tpu.memory_space<vmem>>, vector<1x1x8x16xf32>
    %139 = vector.shape_cast %138 : vector<1x1x8x16xf32> to vector<8x16xf32>
    %140 = vector.shape_cast %137 : vector<8x16xf32> to vector<1x1x8x16xf32>
    tpu.vector_store %arg5[%c0_65, %c6_66, %c0_67, %c0_68], %140 {strides = array<i32>} : memref<1x16x8x16xf32, #tpu.memory_space<vmem>>, vector<1x1x8x16xf32>,
    %c0_69 = arith.constant 0 : index
    %c7 = arith.constant 7 : index
    %141 = memref.load %arg2[%c0_69, %c7] : memref<3x16xf32, #tpu.memory_space<smem>>
    %c1_70 = arith.constant 1 : index
    %c7_71 = arith.constant 7 : index
    %142 = memref.load %arg2[%c1_70, %c7_71] : memref<3x16xf32, #tpu.memory_space<smem>>
    %c2_72 = arith.constant 2 : index
    %c7_73 = arith.constant 7 : index
    %143 = memref.load %arg2[%c2_72, %c7_73] : memref<3x16xf32, #tpu.memory_space<smem>>
    %144 = vector.broadcast %141 : f32 to vector<8x16xf32>
    %145 = arith.mulf %1, %144 : vector<8x16xf32>
    %146 = vector.broadcast %142 : f32 to vector<8x16xf32>
    %147 = arith.mulf %4, %146 : vector<8x16xf32>
    %148 = arith.addf %145, %147 : vector<8x16xf32>
    %149 = vector.broadcast %143 : f32 to vector<8x16xf32>
    %150 = arith.mulf %6, %149 : vector<8x16xf32>
    %151 = arith.addf %148, %150 : vector<8x16xf32>
    %152 = vector.extract_strided_slice %7 {offsets = [7, 0], sizes = [1, 16], strides = [1, 1]} : vector<16x16xf32> to vector<1x16xf32>
    %153 = vector.shape_cast %152 : vector<1x16xf32> to vector<16xf32>
    %154 = vector.shape_cast %153 : vector<16xf32> to vector<1x16xf32>
    %155 = vector.broadcast %154 : vector<1x16xf32> to vector<8x16xf32>
    %156 = arith.addf %151, %155 : vector<8x16xf32>
    %c0_74 = arith.constant 0 : index
    %c7_75 = arith.constant 7 : index
    %c0_76 = arith.constant 0 : index
    %c0_77 = arith.constant 0 : index
    %157 = vector.load %arg5[%c0_74, %c7_75, %c0_76, %c0_77] : memref<1x16x8x16xf32, #tpu.memory_space<vmem>>, vector<1x1x8x16xf32>
    %158 = vector.shape_cast %157 : vector<1x1x8x16xf32> to vector<8x16xf32>
    %159 = vector.shape_cast %156 : vector<8x16xf32> to vector<1x1x8x16xf32>
    tpu.vector_store %arg5[%c0_74, %c7_75, %c0_76, %c0_77], %159 {strides = array<i32>} : memref<1x16x8x16xf32, #tpu.memory_space<vmem>>, vector<1x1x8x16xf32>,
    %c0_78 = arith.constant 0 : index
    %c8 = arith.constant 8 : index
    %160 = memref.load %arg2[%c0_78, %c8] : memref<3x16xf32, #tpu.memory_space<smem>>
    %c1_79 = arith.constant 1 : index
    %c8_80 = arith.constant 8 : index
    %161 = memref.load %arg2[%c1_79, %c8_80] : memref<3x16xf32, #tpu.memory_space<smem>>
    %c2_81 = arith.constant 2 : index
    %c8_82 = arith.constant 8 : index
    %162 = memref.load %arg2[%c2_81, %c8_82] : memref<3x16xf32, #tpu.memory_space<smem>>
    %163 = vector.broadcast %160 : f32 to vector<8x16xf32>
    %164 = arith.mulf %1, %163 : vector<8x16xf32>
    %165 = vector.broadcast %161 : f32 to vector<8x16xf32>
    %166 = arith.mulf %4, %165 : vector<8x16xf32>
    %167 = arith.addf %164, %166 : vector<8x16xf32>
    %168 = vector.broadcast %162 : f32 to vector<8x16xf32>
    %169 = arith.mulf %6, %168 : vector<8x16xf32>
    %170 = arith.addf %167, %169 : vector<8x16xf32>
    %171 = vector.extract_strided_slice %7 {offsets = [8, 0], sizes = [1, 16], strides = [1, 1]} : vector<16x16xf32> to vector<1x16xf32>
    %172 = vector.shape_cast %171 : vector<1x16xf32> to vector<16xf32>
    %173 = vector.shape_cast %172 : vector<16xf32> to vector<1x16xf32>
    %174 = vector.broadcast %173 : vector<1x16xf32> to vector<8x16xf32>
    %175 = arith.addf %170, %174 : vector<8x16xf32>
    %c0_83 = arith.constant 0 : index
    %c8_84 = arith.constant 8 : index
    %c0_85 = arith.constant 0 : index
    %c0_86 = arith.constant 0 : index
    %176 = vector.load %arg5[%c0_83, %c8_84, %c0_85, %c0_86] : memref<1x16x8x16xf32, #tpu.memory_space<vmem>>, vector<1x1x8x16xf32>
    %177 = vector.shape_cast %176 : vector<1x1x8x16xf32> to vector<8x16xf32>
    %178 = vector.shape_cast %175 : vector<8x16xf32> to vector<1x1x8x16xf32>
    tpu.vector_store %arg5[%c0_83, %c8_84, %c0_85, %c0_86], %178 {strides = array<i32>} : memref<1x16x8x16xf32, #tpu.memory_space<vmem>>, vector<1x1x8x16xf32>,
    %c0_87 = arith.constant 0 : index
    %c9 = arith.constant 9 : index
    %179 = memref.load %arg2[%c0_87, %c9] : memref<3x16xf32, #tpu.memory_space<smem>>
    %c1_88 = arith.constant 1 : index
    %c9_89 = arith.constant 9 : index
    %180 = memref.load %arg2[%c1_88, %c9_89] : memref<3x16xf32, #tpu.memory_space<smem>>
    %c2_90 = arith.constant 2 : index
    %c9_91 = arith.constant 9 : index
    %181 = memref.load %arg2[%c2_90, %c9_91] : memref<3x16xf32, #tpu.memory_space<smem>>
    %182 = vector.broadcast %179 : f32 to vector<8x16xf32>
    %183 = arith.mulf %1, %182 : vector<8x16xf32>
    %184 = vector.broadcast %180 : f32 to vector<8x16xf32>
    %185 = arith.mulf %4, %184 : vector<8x16xf32>
    %186 = arith.addf %183, %185 : vector<8x16xf32>
    %187 = vector.broadcast %181 : f32 to vector<8x16xf32>
    %188 = arith.mulf %6, %187 : vector<8x16xf32>
    %189 = arith.addf %186, %188 : vector<8x16xf32>
    %190 = vector.extract_strided_slice %7 {offsets = [9, 0], sizes = [1, 16], strides = [1, 1]} : vector<16x16xf32> to vector<1x16xf32>
    %191 = vector.shape_cast %190 : vector<1x16xf32> to vector<16xf32>
    %192 = vector.shape_cast %191 : vector<16xf32> to vector<1x16xf32>
    %193 = vector.broadcast %192 : vector<1x16xf32> to vector<8x16xf32>
    %194 = arith.addf %189, %193 : vector<8x16xf32>
    %c0_92 = arith.constant 0 : index
    %c9_93 = arith.constant 9 : index
    %c0_94 = arith.constant 0 : index
    %c0_95 = arith.constant 0 : index
    %195 = vector.load %arg5[%c0_92, %c9_93, %c0_94, %c0_95] : memref<1x16x8x16xf32, #tpu.memory_space<vmem>>, vector<1x1x8x16xf32>
    %196 = vector.shape_cast %195 : vector<1x1x8x16xf32> to vector<8x16xf32>
    %197 = vector.shape_cast %194 : vector<8x16xf32> to vector<1x1x8x16xf32>
    tpu.vector_store %arg5[%c0_92, %c9_93, %c0_94, %c0_95], %197 {strides = array<i32>} : memref<1x16x8x16xf32, #tpu.memory_space<vmem>>, vector<1x1x8x16xf32>,
    %c0_96 = arith.constant 0 : index
    %c10 = arith.constant 10 : index
    %198 = memref.load %arg2[%c0_96, %c10] : memref<3x16xf32, #tpu.memory_space<smem>>
    %c1_97 = arith.constant 1 : index
    %c10_98 = arith.constant 10 : index
    %199 = memref.load %arg2[%c1_97, %c10_98] : memref<3x16xf32, #tpu.memory_space<smem>>
    %c2_99 = arith.constant 2 : index
    %c10_100 = arith.constant 10 : index
    %200 = memref.load %arg2[%c2_99, %c10_100] : memref<3x16xf32, #tpu.memory_space<smem>>
    %201 = vector.broadcast %198 : f32 to vector<8x16xf32>
    %202 = arith.mulf %1, %201 : vector<8x16xf32>
    %203 = vector.broadcast %199 : f32 to vector<8x16xf32>
    %204 = arith.mulf %4, %203 : vector<8x16xf32>
    %205 = arith.addf %202, %204 : vector<8x16xf32>
    %206 = vector.broadcast %200 : f32 to vector<8x16xf32>
    %207 = arith.mulf %6, %206 : vector<8x16xf32>
    %208 = arith.addf %205, %207 : vector<8x16xf32>
    %209 = vector.extract_strided_slice %7 {offsets = [10, 0], sizes = [1, 16], strides = [1, 1]} : vector<16x16xf32> to vector<1x16xf32>
    %210 = vector.shape_cast %209 : vector<1x16xf32> to vector<16xf32>
    %211 = vector.shape_cast %210 : vector<16xf32> to vector<1x16xf32>
    %212 = vector.broadcast %211 : vector<1x16xf32> to vector<8x16xf32>
    %213 = arith.addf %208, %212 : vector<8x16xf32>
    %c0_101 = arith.constant 0 : index
    %c10_102 = arith.constant 10 : index
    %c0_103 = arith.constant 0 : index
    %c0_104 = arith.constant 0 : index
    %214 = vector.load %arg5[%c0_101, %c10_102, %c0_103, %c0_104] : memref<1x16x8x16xf32, #tpu.memory_space<vmem>>, vector<1x1x8x16xf32>
    %215 = vector.shape_cast %214 : vector<1x1x8x16xf32> to vector<8x16xf32>
    %216 = vector.shape_cast %213 : vector<8x16xf32> to vector<1x1x8x16xf32>
    tpu.vector_store %arg5[%c0_101, %c10_102, %c0_103, %c0_104], %216 {strides = array<i32>} : memref<1x16x8x16xf32, #tpu.memory_space<vmem>>, vector<1x1x8x16xf32>,
    %c0_105 = arith.constant 0 : index
    %c11 = arith.constant 11 : index
    %217 = memref.load %arg2[%c0_105, %c11] : memref<3x16xf32, #tpu.memory_space<smem>>
    %c1_106 = arith.constant 1 : index
    %c11_107 = arith.constant 11 : index
    %218 = memref.load %arg2[%c1_106, %c11_107] : memref<3x16xf32, #tpu.memory_space<smem>>
    %c2_108 = arith.constant 2 : index
    %c11_109 = arith.constant 11 : index
    %219 = memref.load %arg2[%c2_108, %c11_109] : memref<3x16xf32, #tpu.memory_space<smem>>
    %220 = vector.broadcast %217 : f32 to vector<8x16xf32>
    %221 = arith.mulf %1, %220 : vector<8x16xf32>
    %222 = vector.broadcast %218 : f32 to vector<8x16xf32>
    %223 = arith.mulf %4, %222 : vector<8x16xf32>
    %224 = arith.addf %221, %223 : vector<8x16xf32>
    %225 = vector.broadcast %219 : f32 to vector<8x16xf32>
    %226 = arith.mulf %6, %225 : vector<8x16xf32>
    %227 = arith.addf %224, %226 : vector<8x16xf32>
    %228 = vector.extract_strided_slice %7 {offsets = [11, 0], sizes = [1, 16], strides = [1, 1]} : vector<16x16xf32> to vector<1x16xf32>
    %229 = vector.shape_cast %228 : vector<1x16xf32> to vector<16xf32>
    %230 = vector.shape_cast %229 : vector<16xf32> to vector<1x16xf32>
    %231 = vector.broadcast %230 : vector<1x16xf32> to vector<8x16xf32>
    %232 = arith.addf %227, %231 : vector<8x16xf32>
    %c0_110 = arith.constant 0 : index
    %c11_111 = arith.constant 11 : index
    %c0_112 = arith.constant 0 : index
    %c0_113 = arith.constant 0 : index
    %233 = vector.load %arg5[%c0_110, %c11_111, %c0_112, %c0_113] : memref<1x16x8x16xf32, #tpu.memory_space<vmem>>, vector<1x1x8x16xf32>
    %234 = vector.shape_cast %233 : vector<1x1x8x16xf32> to vector<8x16xf32>
    %235 = vector.shape_cast %232 : vector<8x16xf32> to vector<1x1x8x16xf32>
    tpu.vector_store %arg5[%c0_110, %c11_111, %c0_112, %c0_113], %235 {strides = array<i32>} : memref<1x16x8x16xf32, #tpu.memory_space<vmem>>, vector<1x1x8x16xf32>,
    %c0_114 = arith.constant 0 : index
    %c12 = arith.constant 12 : index
    %236 = memref.load %arg2[%c0_114, %c12] : memref<3x16xf32, #tpu.memory_space<smem>>
    %c1_115 = arith.constant 1 : index
    %c12_116 = arith.constant 12 : index
    %237 = memref.load %arg2[%c1_115, %c12_116] : memref<3x16xf32, #tpu.memory_space<smem>>
    %c2_117 = arith.constant 2 : index
    %c12_118 = arith.constant 12 : index
    %238 = memref.load %arg2[%c2_117, %c12_118] : memref<3x16xf32, #tpu.memory_space<smem>>
    %239 = vector.broadcast %236 : f32 to vector<8x16xf32>
    %240 = arith.mulf %1, %239 : vector<8x16xf32>
    %241 = vector.broadcast %237 : f32 to vector<8x16xf32>
    %242 = arith.mulf %4, %241 : vector<8x16xf32>
    %243 = arith.addf %240, %242 : vector<8x16xf32>
    %244 = vector.broadcast %238 : f32 to vector<8x16xf32>
    %245 = arith.mulf %6, %244 : vector<8x16xf32>
    %246 = arith.addf %243, %245 : vector<8x16xf32>
    %247 = vector.extract_strided_slice %7 {offsets = [12, 0], sizes = [1, 16], strides = [1, 1]} : vector<16x16xf32> to vector<1x16xf32>
    %248 = vector.shape_cast %247 : vector<1x16xf32> to vector<16xf32>
    %249 = vector.shape_cast %248 : vector<16xf32> to vector<1x16xf32>
    %250 = vector.broadcast %249 : vector<1x16xf32> to vector<8x16xf32>
    %251 = arith.addf %246, %250 : vector<8x16xf32>
    %c0_119 = arith.constant 0 : index
    %c12_120 = arith.constant 12 : index
    %c0_121 = arith.constant 0 : index
    %c0_122 = arith.constant 0 : index
    %252 = vector.load %arg5[%c0_119, %c12_120, %c0_121, %c0_122] : memref<1x16x8x16xf32, #tpu.memory_space<vmem>>, vector<1x1x8x16xf32>
    %253 = vector.shape_cast %252 : vector<1x1x8x16xf32> to vector<8x16xf32>
    %254 = vector.shape_cast %251 : vector<8x16xf32> to vector<1x1x8x16xf32>
    tpu.vector_store %arg5[%c0_119, %c12_120, %c0_121, %c0_122], %254 {strides = array<i32>} : memref<1x16x8x16xf32, #tpu.memory_space<vmem>>, vector<1x1x8x16xf32>,
    %c0_123 = arith.constant 0 : index
    %c13 = arith.constant 13 : index
    %255 = memref.load %arg2[%c0_123, %c13] : memref<3x16xf32, #tpu.memory_space<smem>>
    %c1_124 = arith.constant 1 : index
    %c13_125 = arith.constant 13 : index
    %256 = memref.load %arg2[%c1_124, %c13_125] : memref<3x16xf32, #tpu.memory_space<smem>>
    %c2_126 = arith.constant 2 : index
    %c13_127 = arith.constant 13 : index
    %257 = memref.load %arg2[%c2_126, %c13_127] : memref<3x16xf32, #tpu.memory_space<smem>>
    %258 = vector.broadcast %255 : f32 to vector<8x16xf32>
    %259 = arith.mulf %1, %258 : vector<8x16xf32>
    %260 = vector.broadcast %256 : f32 to vector<8x16xf32>
    %261 = arith.mulf %4, %260 : vector<8x16xf32>
    %262 = arith.addf %259, %261 : vector<8x16xf32>
    %263 = vector.broadcast %257 : f32 to vector<8x16xf32>
    %264 = arith.mulf %6, %263 : vector<8x16xf32>
    %265 = arith.addf %262, %264 : vector<8x16xf32>
    %266 = vector.extract_strided_slice %7 {offsets = [13, 0], sizes = [1, 16], strides = [1, 1]} : vector<16x16xf32> to vector<1x16xf32>
    %267 = vector.shape_cast %266 : vector<1x16xf32> to vector<16xf32>
    %268 = vector.shape_cast %267 : vector<16xf32> to vector<1x16xf32>
    %269 = vector.broadcast %268 : vector<1x16xf32> to vector<8x16xf32>
    %270 = arith.addf %265, %269 : vector<8x16xf32>
    %c0_128 = arith.constant 0 : index
    %c13_129 = arith.constant 13 : index
    %c0_130 = arith.constant 0 : index
    %c0_131 = arith.constant 0 : index
    %271 = vector.load %arg5[%c0_128, %c13_129, %c0_130, %c0_131] : memref<1x16x8x16xf32, #tpu.memory_space<vmem>>, vector<1x1x8x16xf32>
    %272 = vector.shape_cast %271 : vector<1x1x8x16xf32> to vector<8x16xf32>
    %273 = vector.shape_cast %270 : vector<8x16xf32> to vector<1x1x8x16xf32>
    tpu.vector_store %arg5[%c0_128, %c13_129, %c0_130, %c0_131], %273 {strides = array<i32>} : memref<1x16x8x16xf32, #tpu.memory_space<vmem>>, vector<1x1x8x16xf32>,
    %c0_132 = arith.constant 0 : index
    %c14 = arith.constant 14 : index
    %274 = memref.load %arg2[%c0_132, %c14] : memref<3x16xf32, #tpu.memory_space<smem>>
    %c1_133 = arith.constant 1 : index
    %c14_134 = arith.constant 14 : index
    %275 = memref.load %arg2[%c1_133, %c14_134] : memref<3x16xf32, #tpu.memory_space<smem>>
    %c2_135 = arith.constant 2 : index
    %c14_136 = arith.constant 14 : index
    %276 = memref.load %arg2[%c2_135, %c14_136] : memref<3x16xf32, #tpu.memory_space<smem>>
    %277 = vector.broadcast %274 : f32 to vector<8x16xf32>
    %278 = arith.mulf %1, %277 : vector<8x16xf32>
    %279 = vector.broadcast %275 : f32 to vector<8x16xf32>
    %280 = arith.mulf %4, %279 : vector<8x16xf32>
    %281 = arith.addf %278, %280 : vector<8x16xf32>
    %282 = vector.broadcast %276 : f32 to vector<8x16xf32>
    %283 = arith.mulf %6, %282 : vector<8x16xf32>
    %284 = arith.addf %281, %283 : vector<8x16xf32>
    %285 = vector.extract_strided_slice %7 {offsets = [14, 0], sizes = [1, 16], strides = [1, 1]} : vector<16x16xf32> to vector<1x16xf32>
    %286 = vector.shape_cast %285 : vector<1x16xf32> to vector<16xf32>
    %287 = vector.shape_cast %286 : vector<16xf32> to vector<1x16xf32>
    %288 = vector.broadcast %287 : vector<1x16xf32> to vector<8x16xf32>
    %289 = arith.addf %284, %288 : vector<8x16xf32>
    %c0_137 = arith.constant 0 : index
    %c14_138 = arith.constant 14 : index
    %c0_139 = arith.constant 0 : index
    %c0_140 = arith.constant 0 : index
    %290 = vector.load %arg5[%c0_137, %c14_138, %c0_139, %c0_140] : memref<1x16x8x16xf32, #tpu.memory_space<vmem>>, vector<1x1x8x16xf32>
    %291 = vector.shape_cast %290 : vector<1x1x8x16xf32> to vector<8x16xf32>
    %292 = vector.shape_cast %289 : vector<8x16xf32> to vector<1x1x8x16xf32>
    tpu.vector_store %arg5[%c0_137, %c14_138, %c0_139, %c0_140], %292 {strides = array<i32>} : memref<1x16x8x16xf32, #tpu.memory_space<vmem>>, vector<1x1x8x16xf32>,
    %c0_141 = arith.constant 0 : index
    %c15 = arith.constant 15 : index
    %293 = memref.load %arg2[%c0_141, %c15] : memref<3x16xf32, #tpu.memory_space<smem>>
    %c1_142 = arith.constant 1 : index
    %c15_143 = arith.constant 15 : index
    %294 = memref.load %arg2[%c1_142, %c15_143] : memref<3x16xf32, #tpu.memory_space<smem>>
    %c2_144 = arith.constant 2 : index
    %c15_145 = arith.constant 15 : index
    %295 = memref.load %arg2[%c2_144, %c15_145] : memref<3x16xf32, #tpu.memory_space<smem>>
    %296 = vector.broadcast %293 : f32 to vector<8x16xf32>
    %297 = arith.mulf %1, %296 : vector<8x16xf32>
    %298 = vector.broadcast %294 : f32 to vector<8x16xf32>
    %299 = arith.mulf %4, %298 : vector<8x16xf32>
    %300 = arith.addf %297, %299 : vector<8x16xf32>
    %301 = vector.broadcast %295 : f32 to vector<8x16xf32>
    %302 = arith.mulf %6, %301 : vector<8x16xf32>
    %303 = arith.addf %300, %302 : vector<8x16xf32>
    %304 = vector.extract_strided_slice %7 {offsets = [15, 0], sizes = [1, 16], strides = [1, 1]} : vector<16x16xf32> to vector<1x16xf32>
    %305 = vector.shape_cast %304 : vector<1x16xf32> to vector<16xf32>
    %306 = vector.shape_cast %305 : vector<16xf32> to vector<1x16xf32>
    %307 = vector.broadcast %306 : vector<1x16xf32> to vector<8x16xf32>
    %308 = arith.addf %303, %307 : vector<8x16xf32>
    %c0_146 = arith.constant 0 : index
    %c15_147 = arith.constant 15 : index
    %c0_148 = arith.constant 0 : index
    %c0_149 = arith.constant 0 : index
    %309 = vector.load %arg5[%c0_146, %c15_147, %c0_148, %c0_149] : memref<1x16x8x16xf32, #tpu.memory_space<vmem>>, vector<1x1x8x16xf32>
    %310 = vector.shape_cast %309 : vector<1x1x8x16xf32> to vector<8x16xf32>
    %311 = vector.shape_cast %308 : vector<8x16xf32> to vector<1x1x8x16xf32>
    tpu.vector_store %arg5[%c0_146, %c15_147, %c0_148, %c0_149], %311 {strides = array<i32>} : memref<1x16x8x16xf32, #tpu.memory_space<vmem>>, vector<1x1x8x16xf32>,
    return
  }
  func.func @transform_0(%arg0: i32, %arg1: i32) -> (i32, i32) {
    %c0_i32 = arith.constant 0 : i32
    %c0_i32_0 = arith.constant 0 : i32
    %c0_i32_1 = arith.constant 0 : i32
    return %c0_i32, %c0_i32_0 : i32, i32
  }
  func.func @transform_1(%arg0: i32, %arg1: i32) -> (i32, i32, i32, i32) {
    %c0_i32 = arith.constant 0 : i32
    %c0_i32_0 = arith.constant 0 : i32
    %c0_i32_1 = arith.constant 0 : i32
    return %arg0, %c0_i32, %arg1, %c0_i32_0 : i32, i32, i32, i32
  }
  func.func @transform_2(%arg0: i32, %arg1: i32) -> (i32, i32) {
    %c0_i32 = arith.constant 0 : i32
    %c0_i32_0 = arith.constant 0 : i32
    %c0_i32_1 = arith.constant 0 : i32
    return %c0_i32, %c0_i32_0 : i32, i32
  }
  func.func @transform_3(%arg0: i32, %arg1: i32) -> (i32, i32, i32, i32) {
    %c0_i32 = arith.constant 0 : i32
    %c0_i32_0 = arith.constant 0 : i32
    %c0_i32_1 = arith.constant 0 : i32
    return %arg0, %c0_i32, %arg1, %c0_i32_0 : i32, i32, i32, i32
  }
}

</mosaic_0001>

<llo_original>
// kernel: tpu_custom_call.1
$region0: #{tpu_custom_call.1}
  #allocation0 [shape = 'u32[]', space=smem, size = 0x4, offset = 0x4, fixed_abs, tag = 'smem constant byte address 0x4 - core index']
  #allocation1 [shape = 'u32[72,128]{1,0:T(1,128)}', space=vmem, size = 0x9000, scoped, tag = 'internal scratch']
  %s0 = inlined_call_operand.hbm [shape: f32[3,16], index: 0, kind: input, shape index: {}]
  %s1 = inlined_call_operand.hbm [shape: f32[2,1,8,16], index: 1, kind: input, shape index: {}]
  %s2 = inlined_call_operand.hbm [shape: f32[16,16], index: 2, kind: input, shape index: {}]
  %s3 = inlined_call_operand.hbm [shape: f32[2,16,8,16], index: 3, kind: output, shape index: {}]
  %s4 = sld [smem:[#allocation0]]
  $region57: #{tpu_custom_call.1} parent=0
    _
  %s6 = ssub.s32 1, %s4
  %s7 = scalar_select 0, %s6, %s4
  $region1: #{tpu_custom_call.1} parent=0
    #allocation2 [shape = 'u8[2048]{0}', space=smem, size = 0x800, scoped, tag = 'input window, operand 0, single buffered']
    #allocation3 [shape = 's32[2]{0}', space=sflag, size = 0x8, scoped, tag = 'scoped memory for tpu_custom_call.1']
    #allocation4 [shape = 's32[2]{0}', space=sflag, size = 0x8, scoped, tag = 'scoped memory for tpu_custom_call.1']
    #allocation5 [shape = 's32[2]{0}', space=sflag, size = 0x8, scoped, tag = 'scoped memory for tpu_custom_call.1']
    #allocation6 [shape = 'u8[8192]{0}', space=vmem, size = 0x2000, scoped, tag = 'input window, operand 1']
    #allocation7 [shape = 'u8[8192]{0}', space=vmem, size = 0x2000, scoped, tag = 'input window, operand 2, single buffered']
    #allocation8 [shape = 's32[1]{0}', space=sflag, size = 0x4, scoped, tag = 'scoped memory for tpu_custom_call.1']
    #allocation9 [shape = 'u8[131072]{0}', space=vmem, size = 0x20000, scoped, tag = 'output window, operand 0']
    %8 = vsyncpa [#allocation5], 0
    %9 = vsyncpa [#allocation3], 0
    %s10 = scalar_lea.sflag [#allocation3], 1
    %11 = vsyncpa %s10, 0
    %12 = vsyncpa [#allocation8], 0
    %13 = vsyncpa [#allocation4], 0
    %s14 = scalar_lea.sflag [#allocation4], 1
    %15 = vsyncpa %s14, 0
    loop: start=0, step=1, limit=4
    $region2: #{tpu_custom_call.1} parent=1 // loop_pre_header
      _
    $region3: #{tpu_custom_call.1} parent=1 // loop_header
      %s17 = sphi 0, %s21
      %p18 = scmp.ge.s32.totalorder %s17, 4
      %s24 = sphi 0, %s36
      %s25 = sphi 0, %s32
      %s26 = sphi 0, %s24
      %s27 = sphi 0, %s25
      %s28 = sphi 0, %s26
      %s29 = sphi 0, %s27
      %s37 = sphi 0, %s37
      %s39 = sphi 0, %s37
      %s40 = sphi 0, %s39
      %s54 = sphi 0, %s40
      %s62 = sphi 0, %s64
      %s65 = sphi 0, %s62
      %s66 = sphi 0, %s65
      %s82 = sphi 0, %s66
      %s86 = sphi 0, %s86
      %s88 = sphi 0, %s86
      %s89 = sphi 0, %s88
      %s103 = sphi 0, %s89
      %s111 = sphi 0, %s113
      %s114 = sphi 0, %s111
      %s115 = sphi 0, %s114
      %s131 = sphi 0, %s115
    $region4: #{tpu_custom_call.1} parent=1 // loop_header_branch
      %20 = sbr.rel (%p18) target = $region8
    $region5: #{tpu_custom_call.1} parent=1 // loop_body
      %s22 = ssub.s32 %s17, 1
      %s23 = ssub.s32 %s17, 2
      %s30 = sadd.s32 1, %s25
      %p31 = scmp.ge.s32.totalorder %s30, 1
      %s32 = scalar_select %p31, 0, %s30
      %s33 = sadd.s32 1, %s24
      %s34 = scalar_select %p31, %s33, %s24
      %p35 = scmp.ge.s32.totalorder %s34, 2
      %s36 = scalar_select %p35, 0, %s34
      %s38 = sadd.s32 %s37, 1
      %p41 = scmp.eq.s32.totalorder %s17, 1
      %p42 = scmp.ne.s32.totalorder %s37, %s39
      %p43 = scmp.eq.s32.totalorder %s17, 0
      %p44 = por %p42, %p43
      %p45 = scmp.ne.s32.totalorder %s37, %s39
      %p46 = scmp.eq.s32.totalorder %s22, 1
      %p47 = por %p45, %p46
      %p48 = scmp.ne.s32.totalorder %s39, %s40
      %p49 = scmp.eq.s32.totalorder %s22, 0
      %p50 = por %p48, %p49
      %p51 = scmp.ne.s32.totalorder %s39, %s40
      %p52 = scmp.eq.s32.totalorder %s23, 1
      %p53 = por %p51, %p52
      %p55 = scmp.ne.s32.totalorder %s40, %s54
      %p56 = scmp.eq.s32.totalorder %s23, 0
      %p57 = por %p55, %p56
      %s58 = ssub.s32 %s24, %s36
      %s59 = ssub.s32 %s25, %s32
      %s60 = sor.u32 %s58, %s59
      %p61 = scmp.eq.s32.totalorder %s60, 0
      %s63 = sadd.s32 %s62, 1
      %s64 = scalar_select %p61, %s62, %s63
      %p67 = pneg %p61
      %p68 = scmp.eq.s32.totalorder %s17, 1
      %p69 = por %p67, %p68
      %p70 = scmp.ne.s32.totalorder %s62, %s65
      %p71 = scmp.eq.s32.totalorder %s17, 0
      %p72 = por %p70, %p71
      %p73 = scmp.ne.s32.totalorder %s62, %s65
      %p74 = scmp.eq.s32.totalorder %s22, 1
      %p75 = por %p73, %p74
      %p76 = scmp.ne.s32.totalorder %s65, %s66
      %p77 = scmp.eq.s32.totalorder %s22, 0
      %p78 = por %p76, %p77
      %p79 = scmp.ne.s32.totalorder %s65, %s66
      %p80 = scmp.eq.s32.totalorder %s23, 1
      %p81 = por %p79, %p80
      %p83 = scmp.ne.s32.totalorder %s66, %s82
      %p84 = scmp.eq.s32.totalorder %s23, 0
      %p85 = por %p83, %p84
      %s87 = sadd.s32 %s86, 1
      %p90 = scmp.eq.s32.totalorder %s17, 1
      %p91 = scmp.ne.s32.totalorder %s86, %s88
      %p92 = scmp.eq.s32.totalorder %s17, 0
      %p93 = por %p91, %p92
      %p94 = scmp.ne.s32.totalorder %s86, %s88
      %p95 = scmp.eq.s32.totalorder %s22, 1
      %p96 = por %p94, %p95
      %p97 = scmp.ne.s32.totalorder %s88, %s89
      %p98 = scmp.eq.s32.totalorder %s22, 0
      %p99 = por %p97, %p98
      %p100 = scmp.ne.s32.totalorder %s88, %s89
      %p101 = scmp.eq.s32.totalorder %s23, 1
      %p102 = por %p100, %p101
      %p104 = scmp.ne.s32.totalorder %s89, %s103
      %p105 = scmp.eq.s32.totalorder %s23, 0
      %p106 = por %p104, %p105
      %s107 = ssub.s32 %s24, %s36
      %s108 = ssub.s32 %s25, %s32
      %s109 = sor.u32 %s107, %s108
      %p110 = scmp.eq.s32.totalorder %s109, 0
      %s112 = sadd.s32 %s111, 1
      %s113 = scalar_select %p110, %s111, %s112
      %p116 = pneg %p110
      %p117 = scmp.eq.s32.totalorder %s17, 1
      %p118 = por %p116, %p117
      %p119 = scmp.ne.s32.totalorder %s111, %s114
      %p120 = scmp.eq.s32.totalorder %s17, 0
      %p121 = por %p119, %p120
      %p122 = scmp.ne.s32.totalorder %s111, %s114
      %p123 = scmp.eq.s32.totalorder %s22, 1
      %p124 = por %p122, %p123
      %p125 = scmp.ne.s32.totalorder %s114, %s115
      %p126 = scmp.eq.s32.totalorder %s22, 0
      %p127 = por %p125, %p126
      %p128 = scmp.ne.s32.totalorder %s114, %s115
      %p129 = scmp.eq.s32.totalorder %s23, 1
      %p130 = por %p128, %p129
      %p132 = scmp.ne.s32.totalorder %s115, %s131
      %p133 = scmp.eq.s32.totalorder %s23, 0
      %p134 = por %p132, %p133
      %p135 = scmp.le.s32.totalorder 1, %s17
      %p136 = scmp.lt.s32.totalorder %s17, 3
      %p137 = pnand %p135, %p136
      %p138 = pneg %p137
      // Predicated region
      $region9: #{tpu_custom_call.1} parent=5 // pred_check
        _
      $region10: #{tpu_custom_call.1} parent=5 // pred_check_branch
        %140 = sbr.rel (%p137) target = $region12
      $region11: #{tpu_custom_call.1} parent=5 // pred_region
        %s141 = ssub.s32 %s17, 1
        // Predicated region
        $region13: #{tpu_custom_call.1} parent=11 // pred_check
          %p142 = pneg %p50
        $region14: #{tpu_custom_call.1} parent=11 // pred_check_branch
          %144 = sbr.rel (%p142) target = $region16
        $region15: #{tpu_custom_call.1} parent=11 // pred_region
          %146 = vsyncadd [#allocation5], 0
          %s148 = sshll.u32 %s0, 4
          %s149 = int_to_ptr.hbm [resolvable:$true] %s148
          %151 = dma.hbm_to_smem %s149, 64, [#allocation2], [#allocation5]
        $region16: #{tpu_custom_call.1} parent=11 // pred_fallthru
          _
        // Predicated region
        $region17: #{tpu_custom_call.1} parent=11 // pred_check
          %p152 = pneg %p99
        $region18: #{tpu_custom_call.1} parent=11 // pred_check_branch
          %154 = sbr.rel (%p152) target = $region20
        $region19: #{tpu_custom_call.1} parent=11 // pred_region
          %156 = vsyncadd [#allocation8], 0
          %s157 = sshll.u32 %s2, 4
          %s158 = int_to_ptr.hbm [resolvable:$true] %s157
          %s159 = sshll.u32 [#allocation7], 4
          %s160 = int_to_ptr.vmem [resolvable:$true] %s159
          %165 = dma.hbm_to_vmem [thread:$0]  %s158, 256, %s160, [#allocation8], 128, 128, 8
        $region20: #{tpu_custom_call.1} parent=11 // pred_fallthru
          _
      $region12: #{tpu_custom_call.1} parent=5 // pred_fallthru
        _
      %p166 = scmp.lt.s32.totalorder %s17, 2
      // Predicated region
      $region21: #{tpu_custom_call.1} parent=5 // pred_check
        %p167 = pneg %p166
      $region22: #{tpu_custom_call.1} parent=5 // pred_check_branch
        %169 = sbr.rel (%p167) target = $region24
      $region23: #{tpu_custom_call.1} parent=5 // pred_region
        // Predicated region
        $region25: #{tpu_custom_call.1} parent=23 // pred_check
          %p170 = pneg %p72
        $region26: #{tpu_custom_call.1} parent=23 // pred_check_branch
          %172 = sbr.rel (%p170) target = $region28
        $region27: #{tpu_custom_call.1} parent=23 // pred_region
          %s173 = sand.u32 %s62, 1
          %s174 = scalar_lea.sflag [#allocation3], %s173
          %s175 = sand.u32 %s62, 1
          %s176 = smul.addr %s175, 8
          %s177 = scalar_lea.vmem [#allocation6], %s176
          %179 = vsyncadd %s174, 0
          %s180 = sadd.s32 %s25, %s24
          %s181 = smul.addr %s180, 8
          %s182 = scalar_lea.hbm %s1, %s181
          %s184 = sshll.u32 %s182, 4
          %s185 = int_to_ptr.hbm [resolvable:$true] %s184
          %s186 = sshll.u32 %s177, 4
          %s187 = int_to_ptr.vmem [resolvable:$true] %s186
          %189 = dma.hbm_to_vmem [thread:$0]  %s185, 128, %s187, %s174
        $region28: #{tpu_custom_call.1} parent=23 // pred_fallthru
          _
      $region24: #{tpu_custom_call.1} parent=5 // pred_fallthru
        _
      %p190 = scmp.le.s32.totalorder 1, %s17
      %p191 = scmp.lt.s32.totalorder %s17, 3
      %p192 = pnand %p190, %p191
      %p193 = pneg %p192
      // Predicated region
      $region29: #{tpu_custom_call.1} parent=5 // pred_check
        _
      $region30: #{tpu_custom_call.1} parent=5 // pred_check_branch
        %195 = sbr.rel (%p192) target = $region32
      $region31: #{tpu_custom_call.1} parent=5 // pred_region
        %s196 = ssub.s32 %s17, 1
        // Predicated region
        $region33: #{tpu_custom_call.1} parent=31 // pred_check
          %p197 = pneg %p50
        $region34: #{tpu_custom_call.1} parent=31 // pred_check_branch
          %199 = sbr.rel (%p197) target = $region36
        $region35: #{tpu_custom_call.1} parent=31 // pred_region
          %201 = dma.done [#allocation5], 64
        $region36: #{tpu_custom_call.1} parent=31 // pred_fallthru
          _
        %s202 = sand.u32 %s65, 1
        %s203 = scalar_lea.sflag [#allocation3], %s202
        %s204 = sand.u32 %s65, 1
        %s205 = smul.addr %s204, 8
        %s206 = scalar_lea.vmem [#allocation6], %s205
        // Predicated region
        $region37: #{tpu_custom_call.1} parent=31 // pred_check
          %p207 = pneg %p78
        $region38: #{tpu_custom_call.1} parent=31 // pred_check_branch
          %209 = sbr.rel (%p207) target = $region40
        $region39: #{tpu_custom_call.1} parent=31 // pred_region
          %211 = dma.done %s203, 128
        $region40: #{tpu_custom_call.1} parent=31 // pred_fallthru
          _
        // Predicated region
        $region41: #{tpu_custom_call.1} parent=31 // pred_check
          %p212 = pneg %p99
        $region42: #{tpu_custom_call.1} parent=31 // pred_check_branch
          %214 = sbr.rel (%p212) target = $region44
        $region43: #{tpu_custom_call.1} parent=31 // pred_region
          %216 = dma.done [#allocation8], 256
        $region44: #{tpu_custom_call.1} parent=31 // pred_fallthru
          _
        %217 = sfence
        %p218 = pneg %p50
        %p219 = pneg %p47
        %s220 = sand.u32 %s65, 1
        %s221 = scalar_lea.sflag [#allocation3], %s220
        %s222 = sand.u32 %s65, 1
        %s223 = smul.addr %s222, 8
        %s224 = scalar_lea.vmem [#allocation6], %s223
        %p225 = pneg %p78
        %p226 = pneg %p75
        %p227 = pneg %p99
        %p228 = pneg %p96
        %p229 = pneg %p127
        %p230 = pneg %p124
        %s231 = sand.u32 %s114, 1
        %s232 = scalar_lea.sflag [#allocation4], %s231
        %s233 = sand.u32 %s114, 1
        %s234 = smul.addr %s233, 128
        %s235 = scalar_lea.vmem [#allocation9], %s234
        %v236 = vld [vmem:[%s206] sm:$0xff]
        %238 = vrot.lane.b32.xlu0 %v236, 127
        %v239 = vpop.permute.xlu0 %238
        %vm241 = vcmask 121856
        %v242 = vsel %vm241, %v239, 0.0
        %243 = vrot.lane.b32.xlu0 %v236, 126
        %v244 = vpop.permute.xlu0 %243
        %vm246 = vcmask 113664
        %v247 = vsel %vm246, %v244, 0.0
        %v248 = vsel %vm241, %v247, 0.0
        %v249 = vld [vmem:[#allocation7] sm:$0xff]
        %v250 = vld [vmem:[#allocation7 + $0x8] sm:$0xff]
        %s251 = sld [smem:[#allocation2]]
        %s252 = sld [smem:[#allocation2 + $0x80]]
        %s253 = sld [smem:[#allocation2 + $0x100]]
        %v254 = vstv %s251
        %v255 = vmul.f32 %v236, %v254
        %v256 = vstv %s252
        %v257 = vmul.f32 %v242, %v256
        %v258 = vadd.f32 %v255, %v257
        %v259 = vstv %s253
        %v260 = vmul.f32 %v248, %v259
        %v261 = vadd.f32 %v258, %v260
        %v262 = vperm.slane %v249, 0
        %v263 = vadd.f32 %v261, %v262
        %vm264 = vcmask 130048
        %265 = vst.msk [vmem:[%s235] sm:$0xff] %vm264, %v263
        %s266 = sld [smem:[#allocation2 + $0x1]]
        %s267 = sld [smem:[#allocation2 + $0x81]]
        %s268 = sld [smem:[#allocation2 + $0x101]]
        %v269 = vstv %s266
        %v270 = vmul.f32 %v236, %v269
        %v271 = vstv %s267
        %v272 = vmul.f32 %v242, %v271
        %v273 = vadd.f32 %v270, %v272
        %v274 = vstv %s268
        %v275 = vmul.f32 %v248, %v274
        %v276 = vadd.f32 %v273, %v275
        %v277 = vperm.slane %v249, 1
        %v278 = vadd.f32 %v276, %v277
        %s279 = scalar_lea.vmem %s235, 8 [#allocation9]
        %280 = vst.msk [vmem:[%s279] sm:$0xff] %vm264, %v278
        %s281 = sld [smem:[#allocation2 + $0x2]]
        %s282 = sld [smem:[#allocation2 + $0x82]]
        %s283 = sld [smem:[#allocation2 + $0x102]]
        %v284 = vstv %s281
        %v285 = vmul.f32 %v236, %v284
        %v286 = vstv %s282
        %v287 = vmul.f32 %v242, %v286
        %v288 = vadd.f32 %v285, %v287
        %v289 = vstv %s283
        %v290 = vmul.f32 %v248, %v289
        %v291 = vadd.f32 %v288, %v290
        %v292 = vperm.slane %v249, 2
        %v293 = vadd.f32 %v291, %v292
        %s294 = scalar_lea.vmem %s235, 16 [#allocation9]
        %295 = vst.msk [vmem:[%s294] sm:$0xff] %vm264, %v293
        %s296 = sld [smem:[#allocation2 + $0x3]]
        %s297 = sld [smem:[#allocation2 + $0x83]]
        %s298 = sld [smem:[#allocation2 + $0x103]]
        %v299 = vstv %s296
        %v300 = vmul.f32 %v236, %v299
        %v301 = vstv %s297
        %v302 = vmul.f32 %v242, %v301
        %v303 = vadd.f32 %v300, %v302
        %v304 = vstv %s298
        %v305 = vmul.f32 %v248, %v304
        %v306 = vadd.f32 %v303, %v305
        %v307 = vperm.slane %v249, 3
        %v308 = vadd.f32 %v306, %v307
        %s309 = scalar_lea.vmem %s235, 24 [#allocation9]
        %310 = vst.msk [vmem:[%s309] sm:$0xff] %vm264, %v308
        %s311 = sld [smem:[#allocation2 + $0x4]]
        %s312 = sld [smem:[#allocation2 + $0x84]]
        %s313 = sld [smem:[#allocation2 + $0x104]]
        %v314 = vstv %s311
        %v315 = vmul.f32 %v236, %v314
        %v316 = vstv %s312
        %v317 = vmul.f32 %v242, %v316
        %v318 = vadd.f32 %v315, %v317
        %v319 = vstv %s313
        %v320 = vmul.f32 %v248, %v319
        %v321 = vadd.f32 %v318, %v320
        %v322 = vperm.slane %v249, 4
        %v323 = vadd.f32 %v321, %v322
        %s324 = scalar_lea.vmem %s235, 32 [#allocation9]
        %325 = vst.msk [vmem:[%s324] sm:$0xff] %vm264, %v323
        %s326 = sld [smem:[#allocation2 + $0x5]]
        %s327 = sld [smem:[#allocation2 + $0x85]]
        %s328 = sld [smem:[#allocation2 + $0x105]]
        %v329 = vstv %s326
        %v330 = vmul.f32 %v236, %v329
        %v331 = vstv %s327
        %v332 = vmul.f32 %v242, %v331
        %v333 = vadd.f32 %v330, %v332
        %v334 = vstv %s328
        %v335 = vmul.f32 %v248, %v334
        %v336 = vadd.f32 %v333, %v335
        %v337 = vperm.slane %v249, 5
        %v338 = vadd.f32 %v336, %v337
        %s339 = scalar_lea.vmem %s235, 40 [#allocation9]
        %340 = vst.msk [vmem:[%s339] sm:$0xff] %vm264, %v338
        %s341 = sld [smem:[#allocation2 + $0x6]]
        %s342 = sld [smem:[#allocation2 + $0x86]]
        %s343 = sld [smem:[#allocation2 + $0x106]]
        %v344 = vstv %s341
        %v345 = vmul.f32 %v236, %v344
        %v346 = vstv %s342
        %v347 = vmul.f32 %v242, %v346
        %v348 = vadd.f32 %v345, %v347
        %v349 = vstv %s343
        %v350 = vmul.f32 %v248, %v349
        %v351 = vadd.f32 %v348, %v350
        %v352 = vperm.slane %v249, 6
        %v353 = vadd.f32 %v351, %v352
        %s354 = scalar_lea.vmem %s235, 48 [#allocation9]
        %355 = vst.msk [vmem:[%s354] sm:$0xff] %vm264, %v353
        %s356 = sld [smem:[#allocation2 + $0x7]]
        %s357 = sld [smem:[#allocation2 + $0x87]]
        %s358 = sld [smem:[#allocation2 + $0x107]]
        %v359 = vstv %s356
        %v360 = vmul.f32 %v236, %v359
        %v361 = vstv %s357
        %v362 = vmul.f32 %v242, %v361
        %v363 = vadd.f32 %v360, %v362
        %v364 = vstv %s358
        %v365 = vmul.f32 %v248, %v364
        %v366 = vadd.f32 %v363, %v365
        %v367 = vperm.slane %v249, 7
        %v368 = vadd.f32 %v366, %v367
        %s369 = scalar_lea.vmem %s235, 56 [#allocation9]
        %370 = vst.msk [vmem:[%s369] sm:$0xff] %vm264, %v368
        %s371 = sld [smem:[#allocation2 + $0x8]]
        %s372 = sld [smem:[#allocation2 + $0x88]]
        %s373 = sld [smem:[#allocation2 + $0x108]]
        %v374 = vstv %s371
        %v375 = vmul.f32 %v236, %v374
        %v376 = vstv %s372
        %v377 = vmul.f32 %v242, %v376
        %v378 = vadd.f32 %v375, %v377
        %v379 = vstv %s373
        %v380 = vmul.f32 %v248, %v379
        %v381 = vadd.f32 %v378, %v380
        %v382 = vperm.slane %v250, 0
        %v383 = vadd.f32 %v381, %v382
        %s384 = scalar_lea.vmem %s235, 64 [#allocation9]
        %385 = vst.msk [vmem:[%s384] sm:$0xff] %vm264, %v383
        %s386 = sld [smem:[#allocation2 + $0x9]]
        %s387 = sld [smem:[#allocation2 + $0x89]]
        %s388 = sld [smem:[#allocation2 + $0x109]]
        %v389 = vstv %s386
        %v390 = vmul.f32 %v236, %v389
        %v391 = vstv %s387
        %v392 = vmul.f32 %v242, %v391
        %v393 = vadd.f32 %v390, %v392
        %v394 = vstv %s388
        %v395 = vmul.f32 %v248, %v394
        %v396 = vadd.f32 %v393, %v395
        %v397 = vperm.slane %v250, 1
        %v398 = vadd.f32 %v396, %v397
        %s399 = scalar_lea.vmem %s235, 72 [#allocation9]
        %400 = vst.msk [vmem:[%s399] sm:$0xff] %vm264, %v398
        %s401 = sld [smem:[#allocation2 + $0xa]]
        %s402 = sld [smem:[#allocation2 + $0x8a]]
        %s403 = sld [smem:[#allocation2 + $0x10a]]
        %v404 = vstv %s401
        %v405 = vmul.f32 %v236, %v404
        %v406 = vstv %s402
        %v407 = vmul.f32 %v242, %v406
        %v408 = vadd.f32 %v405, %v407
        %v409 = vstv %s403
        %v410 = vmul.f32 %v248, %v409
        %v411 = vadd.f32 %v408, %v410
        %v412 = vperm.slane %v250, 2
        %v413 = vadd.f32 %v411, %v412
        %s414 = scalar_lea.vmem %s235, 80 [#allocation9]
        %415 = vst.msk [vmem:[%s414] sm:$0xff] %vm264, %v413
        %s416 = sld [smem:[#allocation2 + $0xb]]
        %s417 = sld [smem:[#allocation2 + $0x8b]]
        %s418 = sld [smem:[#allocation2 + $0x10b]]
        %v419 = vstv %s416
        %v420 = vmul.f32 %v236, %v419
        %v421 = vstv %s417
        %v422 = vmul.f32 %v242, %v421
        %v423 = vadd.f32 %v420, %v422
        %v424 = vstv %s418
        %v425 = vmul.f32 %v248, %v424
        %v426 = vadd.f32 %v423, %v425
        %v427 = vperm.slane %v250, 3
        %v428 = vadd.f32 %v426, %v427
        %s429 = scalar_lea.vmem %s235, 88 [#allocation9]
        %430 = vst.msk [vmem:[%s429] sm:$0xff] %vm264, %v428
        %s431 = sld [smem:[#allocation2 + $0xc]]
        %s432 = sld [smem:[#allocation2 + $0x8c]]
        %s433 = sld [smem:[#allocation2 + $0x10c]]
        %v434 = vstv %s431
        %v435 = vmul.f32 %v236, %v434
        %v436 = vstv %s432
        %v437 = vmul.f32 %v242, %v436
        %v438 = vadd.f32 %v435, %v437
        %v439 = vstv %s433
        %v440 = vmul.f32 %v248, %v439
        %v441 = vadd.f32 %v438, %v440
        %v442 = vperm.slane %v250, 4
        %v443 = vadd.f32 %v441, %v442
        %s444 = scalar_lea.vmem %s235, 96 [#allocation9]
        %445 = vst.msk [vmem:[%s444] sm:$0xff] %vm264, %v443
        %s446 = sld [smem:[#allocation2 + $0xd]]
        %s447 = sld [smem:[#allocation2 + $0x8d]]
        %s448 = sld [smem:[#allocation2 + $0x10d]]
        %v449 = vstv %s446
        %v450 = vmul.f32 %v236, %v449
        %v451 = vstv %s447
        %v452 = vmul.f32 %v242, %v451
        %v453 = vadd.f32 %v450, %v452
        %v454 = vstv %s448
        %v455 = vmul.f32 %v248, %v454
        %v456 = vadd.f32 %v453, %v455
        %v457 = vperm.slane %v250, 5
        %v458 = vadd.f32 %v456, %v457
        %s459 = scalar_lea.vmem %s235, 104 [#allocation9]
        %460 = vst.msk [vmem:[%s459] sm:$0xff] %vm264, %v458
        %s461 = sld [smem:[#allocation2 + $0xe]]
        %s462 = sld [smem:[#allocation2 + $0x8e]]
        %s463 = sld [smem:[#allocation2 + $0x10e]]
        %v464 = vstv %s461
        %v465 = vmul.f32 %v236, %v464
        %v466 = vstv %s462
        %v467 = vmul.f32 %v242, %v466
        %v468 = vadd.f32 %v465, %v467
        %v469 = vstv %s463
        %v470 = vmul.f32 %v248, %v469
        %v471 = vadd.f32 %v468, %v470
        %v472 = vperm.slane %v250, 6
        %v473 = vadd.f32 %v471, %v472
        %s474 = scalar_lea.vmem %s235, 112 [#allocation9]
        %475 = vst.msk [vmem:[%s474] sm:$0xff] %vm264, %v473
        %s476 = sld [smem:[#allocation2 + $0xf]]
        %s477 = sld [smem:[#allocation2 + $0x8f]]
        %s478 = sld [smem:[#allocation2 + $0x10f]]
        %v479 = vstv %s476
        %v480 = vmul.f32 %v236, %v479
        %v481 = vstv %s477
        %v482 = vmul.f32 %v242, %v481
        %v483 = vadd.f32 %v480, %v482
        %v484 = vstv %s478
        %v485 = vmul.f32 %v248, %v484
        %v486 = vadd.f32 %v483, %v485
        %v487 = vperm.slane %v250, 7
        %v488 = vadd.f32 %v486, %v487
        %s489 = scalar_lea.vmem %s235, 120 [#allocation9]
        %490 = vst.msk [vmem:[%s489] sm:$0xff] %vm264, %v488
        %s491 = sand.u32 %s114, 1
        %s492 = scalar_lea.sflag [#allocation4], %s491
        %s493 = sand.u32 %s114, 1
        %s494 = smul.addr %s493, 128
        %s495 = scalar_lea.vmem [#allocation9], %s494
        // Predicated region
        $region45: #{tpu_custom_call.1} parent=31 // pred_check
          %p496 = pneg %p124
        $region46: #{tpu_custom_call.1} parent=31 // pred_check_branch
          %498 = sbr.rel (%p496) target = $region48
        $region47: #{tpu_custom_call.1} parent=31 // pred_region
          %500 = vsyncadd %s492, 0
          %s501 = smul.addr %s26, 16
          %s502 = sadd.s32 %s27, %s501
          %s503 = smul.addr %s502, 8
          %s504 = scalar_lea.hbm %s3, %s503
          %s505 = sshll.u32 %s495, 4
          %s506 = int_to_ptr.vmem [resolvable:$true] %s505
          %s507 = sshll.u32 %s504, 4
          %s508 = int_to_ptr.hbm [resolvable:$true] %s507
          %513 = dma.vmem_to_hbm [thread:$0]  %s506, 2048, %s508, %s492, 128, 128, 8
        $region48: #{tpu_custom_call.1} parent=31 // pred_fallthru
          _
      $region32: #{tpu_custom_call.1} parent=5 // pred_fallthru
        _
      %p514 = scmp.le.s32.totalorder 2, %s17
      // Predicated region
      $region49: #{tpu_custom_call.1} parent=5 // pred_check
        %p515 = pneg %p514
      $region50: #{tpu_custom_call.1} parent=5 // pred_check_branch
        %517 = sbr.rel (%p515) target = $region52
      $region51: #{tpu_custom_call.1} parent=5 // pred_region
        %s518 = ssub.s32 %s17, 2
        // Predicated region
        $region53: #{tpu_custom_call.1} parent=51 // pred_check
          %p519 = pneg %p130
        $region54: #{tpu_custom_call.1} parent=51 // pred_check_branch
          %521 = sbr.rel (%p519) target = $region56
        $region55: #{tpu_custom_call.1} parent=51 // pred_region
          %s522 = sand.u32 %s115, 1
          %s523 = scalar_lea.sflag [#allocation4], %s522
          %s524 = sand.u32 %s115, 1
          %s525 = smul.addr %s524, 128
          %s526 = scalar_lea.vmem [#allocation9], %s525
          %528 = dma.done %s523, 2048
        $region56: #{tpu_custom_call.1} parent=51 // pred_fallthru
          _
      $region52: #{tpu_custom_call.1} parent=5 // pred_fallthru
        _
    $region6: #{tpu_custom_call.1} parent=1 // loop_footer
      %s21 = sadd.s32 1, %s17
    $region7: #{tpu_custom_call.1} parent=1 // loop_footer_branch
      %16 = sbr.rel target = $region3
    $region8: #{tpu_custom_call.1} parent=1 // loop_exit
      _
    %529 = vsyncpa [#allocation3], 1
    %s530 = scalar_lea.sflag [#allocation3], 1
    %531 = vsyncpa %s530, 1
    %532 = vsyncpa [#allocation8], 1
    %533 = vsyncpa [#allocation4], 1
    %s534 = scalar_lea.sflag [#allocation4], 1
    %535 = vsyncpa %s534, 1
    %536 = vsyncpa [#allocation5], 1
    %s537 = scalar_lea.sflag [#allocation5], 1
    %538 = vsyncpa %s537, 1

</llo_original>
